<compile_context>
chip_gen: v5e
topology: v5e:2x2
jax: 0.10.0
libtpu: 0.0.40
codegen_flags: <defaults>
</compile_context>

<pallas_src>
import functools

import jax
import jax.numpy as jnp
from jax.experimental import pallas as pl
from jax.experimental.pallas import tpu as pltpu

_LANES = 128


def _round_up(x, m):
    return -(-x // m) * m


def _log1p_pos(y):
    # Accurate log(1 + y) for y in (0, 1] using only ops with guaranteed
    # Mosaic lowerings (no native log1p): 2-term series where 1 + y would
    # round to 1 in f32, plain log(1 + y) otherwise.
    return jnp.where(y < 1e-4, y * (1.0 - 0.5 * y), jnp.log(1.0 + y))


def _log_sigmoid(z):
    # Numerically stable log(sigmoid(z)) = -max(-z, 0) - log1p(exp(-|z|)).
    return -jnp.maximum(-z, 0.0) - _log1p_pos(jnp.exp(-jnp.abs(z)))


def _sigmoid_loss_kernel(x_ref, p_ref, n_ref, *, b, total, block_rows,
                         homogeneous):
    """(block_rows, 128) logits tile -> (1,1,128) per-lane p / n partial sums."""
    blk = block_rows * _LANES
    start = pl.program_id(0) * blk            # flat index of this tile's 1st elem
    x = x_ref[...].astype(jnp.float32)        # bf16/f16 upcast per-tile, in VMEM

    if homogeneous:
        # Wrapper guarantees every block lies entirely in the p half or the
        # n half and never runs past the end of the data, so one scalar
        # predicate replaces the per-element iota/compare/select masking.
        is_p = start < b

        @pl.when(is_p)
        def _():
            col = jnp.sum(_log_sigmoid(x), axis=0)[None, None, :]
            p_ref[...] = col
            n_ref[...] = jnp.zeros_like(col)

        @pl.when(jnp.logical_not(is_p))
        def _():
            col = jnp.sum(_log_sigmoid(-x), axis=0)[None, None, :]
            p_ref[...] = jnp.zeros_like(col)
            n_ref[...] = col
    else:
        # General path: p/n split + tail masking from the flat element index.
        local = (jax.lax.broadcasted_iota(jnp.int32, x.shape, 0) * _LANES
                 + jax.lax.broadcasted_iota(jnp.int32, x.shape, 1))
        is_p = local < (b - start)                    # positive-score half
        valid = local < (total - start)               # masks pad / OOB rows
        z = jnp.where(is_p, x, -x)
        ls = jnp.where(valid, _log_sigmoid(z), 0.0)   # select: garbage-safe
        p_col = jnp.sum(jnp.where(is_p, ls, 0.0), axis=0)
        n_col = jnp.sum(ls, axis=0) - p_col
        p_ref[...] = p_col[None, None, :]
        n_ref[...] = n_col[None, None, :]


@functools.partial(jax.jit, static_argnames=("max_block_rows",))
def sigmoid_loss(rel_logit, rel_labels=None, *, max_block_rows=4096):
    """Pallas implementation of SigmoidLoss.forward (rel_labels is unused)."""
    del rel_labels                       # unused by the reference module forward
    x = jnp.asarray(rel_logit).reshape(-1)
    if x.dtype not in (jnp.float32, jnp.bfloat16, jnp.float16):
        x = x.astype(jnp.float32)

    total = x.shape[0]                   # 2B (odd lengths handled exactly)
    b = total // 2                       # positive-half size
    b_n = total - b                      # negative-half size

    itemsize = jnp.dtype(x.dtype).itemsize
    sub = 8 * (4 // itemsize)            # sublane multiple: 8 f32, 16 bf16/f16
    min_align = sub * _LANES             # smallest legal lane-dense tile

    # Lane-dense view.  Aligned sizes are a pure reshape (no copy); otherwise
    # pad only the tail, once.  Pad values are masked inside the kernel.
    pad = (-total) % min_align
    if pad:
        x = jnp.pad(x, (0, pad))
    rows = (total + pad) // _LANES

    # ~2 MiB f32 per grid step (double-buffered input ~4 MiB) amortizes the
    # ~0.35 us per-step overhead; fits comfortably on v5e/v6e/v7x.
    max_rows = max(sub, (max_block_rows // sub) * sub)
    block_rows = min(rows, max_rows)
    grid = pl.cdiv(rows, block_rows)
    if grid > 1 and grid % 2 == 1:
        # v7x megacore: give the two TensorCores an even, balanced block count.
        block_rows = _round_up(pl.cdiv(rows, grid + 1), sub)
        grid = pl.cdiv(rows, block_rows)

    block_elems = block_rows * _LANES
    homogeneous = (pad == 0 and b % block_elems == 0
                   and total % block_elems == 0)

    kernel = functools.partial(
        _sigmoid_loss_kernel, b=b, total=total, block_rows=block_rows,
        homogeneous=homogeneous)

    p_parts, n_parts = pl.pallas_call(
        kernel,
        out_shape=(jax.ShapeDtypeStruct((grid, 1, _LANES), jnp.float32),
                   jax.ShapeDtypeStruct((grid, 1, _LANES), jnp.float32)),
        grid=(grid,),
        in_specs=[pl.BlockSpec((block_rows, _LANES), lambda i: (i, 0))],
        out_specs=(pl.BlockSpec((1, 1, _LANES), lambda i: (i, 0, 0)),
                   pl.BlockSpec((1, 1, _LANES), lambda i: (i, 0, 0))),
        compiler_params=pltpu.CompilerParams(
            dimension_semantics=("parallel",),
            vmem_limit_bytes=32 * 1024 * 1024),
    )(x.reshape(rows, _LANES))

    # Exact reference semantics: (-mean(ls_p) + -mean(ls_n)) / 2, with the
    # true half sizes (b and total - b) so odd-length inputs also match.
    p_sum = jnp.sum(p_parts, dtype=jnp.float32)
    n_sum = jnp.sum(n_parts, dtype=jnp.float32)
    return -0.5 * (p_sum / b + n_sum / b_n)


def sigmoid_loss_ref(rel_logit, rel_labels=None):
    # Pure-JAX reference of the PyTorch forward.
    rel_logit = jnp.asarray(rel_logit).astype(jnp.float32)
    b = rel_logit.shape[0] // 2
    p = rel_logit[:b]
    n = rel_logit[b:]
    p_loss = -jnp.mean(jax.nn.log_sigmoid(p))
    n_loss = -jnp.mean(jax.nn.log_sigmoid(-n))
    return (p_loss + n_loss) / 2.0


if __name__ == "__main__":
    key = jax.random.PRNGKey(0)
    k1, k2 = jax.random.split(key)

    batchsize = 8
    # rel_logit: (batchsize*2, 1) — first half positive scores, second half negative
    rel_logit = jax.random.normal(k1, (batchsize * 2, 1), dtype=jnp.float32) * 2.0
    # rel_labels: unused by the module, but part of its signature
    rel_labels = jax.random.bernoulli(k2, 0.5, (batchsize * 2, 1)).astype(jnp.float32)

    loss = sigmoid_loss(rel_logit, rel_labels)
    loss = jax.block_until_ready(loss)

    ref = sigmoid_loss_ref(rel_logit, rel_labels)
    assert jnp.allclose(loss, ref, rtol=1e-5, atol=1e-5), (loss, ref)

    print("KERNEL_OK")
</pallas_src>

<mosaic_0001>
module attributes {stable_mosaic.version = 11 : i64} {
  func.func @_sigmoid_loss_kernel(%arg0: i32, %arg1: memref<8x128xf32, #tpu.memory_space<vmem>>, %arg2: memref<1x1x128xf32, #tpu.memory_space<vmem>>, %arg3: memref<1x1x128xf32, #tpu.memory_space<vmem>>) attributes {dimension_semantics = [#tpu.dimension_semantics<parallel>], iteration_bounds = array<i64: 1>, scalar_prefetch = 0 : i64, scratch_operands = 0 : i64, tpu.core_type = #tpu.core_type<tc>, window_params = [{transform_indices = @transform_0, window_bounds = array<i64: 8, 128>}, {transform_indices = @transform_1, window_bounds = array<i64: 1, 1, 128>}, {transform_indices = @transform_2, window_bounds = array<i64: 1, 1, 128>}]} {
    %c1024_i32 = arith.constant 1024 : i32
    %0 = arith.muli %arg0, %c1024_i32 : i32
    %c0 = arith.constant 0 : index
    %c0_0 = arith.constant 0 : index
    %1 = vector.load %arg1[%c0, %c0_0] : memref<8x128xf32, #tpu.memory_space<vmem>>, vector<8x128xf32>
    %2 = tpu.iota {dimensions = array<i32: 0>} : vector<8x128xi32>
    %c128_i32 = arith.constant 128 : i32
    %3 = vector.broadcast %c128_i32 : i32 to vector<8x128xi32>
    %4 = arith.muli %2, %3 : vector<8x128xi32>
    %5 = tpu.iota {dimensions = array<i32: 1>} : vector<8x128xi32>
    %6 = arith.addi %4, %5 : vector<8x128xi32>
    %c8_i32 = arith.constant 8 : i32
    %7 = arith.subi %c8_i32, %0 : i32
    %8 = vector.broadcast %7 : i32 to vector<8x128xi32>
    %9 = arith.cmpi slt, %6, %8 : vector<8x128xi32>
    %c16_i32 = arith.constant 16 : i32
    %10 = arith.subi %c16_i32, %0 : i32
    %11 = vector.broadcast %10 : i32 to vector<8x128xi32>
    %12 = arith.cmpi slt, %6, %11 : vector<8x128xi32>
    %cst = arith.constant 0.000000e+00 : f32
    %13 = vector.broadcast %cst : f32 to vector<8x128xf32>
    %14 = arith.subf %13, %1 : vector<8x128xf32>
    %15 = arith.select %9, %1, %14 : vector<8x128xi1>, vector<8x128xf32>
    %cst_1 = arith.constant 0.000000e+00 : f32
    %16 = vector.broadcast %cst_1 : f32 to vector<8x128xf32>
    %17 = arith.subf %16, %15 : vector<8x128xf32>
    %cst_2 = arith.constant 0.000000e+00 : f32
    %18 = vector.broadcast %cst_2 : f32 to vector<8x128xf32>
    %19 = arith.maximumf %17, %18 : vector<8x128xf32>
    %cst_3 = arith.constant 0.000000e+00 : f32
    %20 = vector.broadcast %cst_3 : f32 to vector<8x128xf32>
    %21 = arith.subf %20, %19 : vector<8x128xf32>
    %22 = math.absf %15 : vector<8x128xf32>
    %cst_4 = arith.constant 0.000000e+00 : f32
    %23 = vector.broadcast %cst_4 : f32 to vector<8x128xf32>
    %24 = arith.subf %23, %22 : vector<8x128xf32>
    %25 = math.exp %24 : vector<8x128xf32>
    %cst_5 = arith.constant 9.99999974E-5 : f32
    %26 = vector.broadcast %cst_5 : f32 to vector<8x128xf32>
    %27 = arith.cmpf olt, %25, %26 : vector<8x128xf32>
    %cst_6 = arith.constant 5.000000e-01 : f32
    %28 = vector.broadcast %cst_6 : f32 to vector<8x128xf32>
    %29 = arith.mulf %28, %25 : vector<8x128xf32>
    %cst_7 = arith.constant 1.000000e+00 : f32
    %30 = vector.broadcast %cst_7 : f32 to vector<8x128xf32>
    %31 = arith.subf %30, %29 : vector<8x128xf32>
    %32 = arith.mulf %25, %31 : vector<8x128xf32>
    %cst_8 = arith.constant 1.000000e+00 : f32
    %33 = vector.broadcast %cst_8 : f32 to vector<8x128xf32>
    %34 = arith.addf %33, %25 : vector<8x128xf32>
    %35 = math.log %34 : vector<8x128xf32>
    %36 = arith.select %27, %32, %35 : vector<8x128xi1>, vector<8x128xf32>
    %37 = arith.subf %21, %36 : vector<8x128xf32>
    %cst_9 = arith.constant 0.000000e+00 : f32
    %38 = vector.broadcast %cst_9 : f32 to vector<8x128xf32>
    %39 = arith.select %12, %37, %38 : vector<8x128xi1>, vector<8x128xf32>
    %cst_10 = arith.constant 0.000000e+00 : f32
    %40 = vector.broadcast %cst_10 : f32 to vector<8x128xf32>
    %41 = arith.select %9, %39, %40 : vector<8x128xi1>, vector<8x128xf32>
    %cst_11 = arith.constant dense<0.000000e+00> : vector<128xf32>
    %42 = vector.multi_reduction <add>, %41, %cst_11 [0] : vector<8x128xf32> to vector<128xf32>
    %cst_12 = arith.constant dense<0.000000e+00> : vector<128xf32>
    %43 = vector.multi_reduction <add>, %39, %cst_12 [0] : vector<8x128xf32> to vector<128xf32>
    %44 = arith.subf %43, %42 : vector<128xf32>
    %45 = vector.shape_cast %42 : vector<128xf32> to vector<1x1x128xf32>
    %c0_13 = arith.constant 0 : index
    %c0_14 = arith.constant 0 : index
    %c0_15 = arith.constant 0 : index
    %46 = vector.load %arg2[%c0_13, %c0_14, %c0_15] : memref<1x1x128xf32, #tpu.memory_space<vmem>>, vector<1x1x128xf32>
    tpu.vector_store %arg2[%c0_13, %c0_14, %c0_15], %45 {strides = array<i32>} : memref<1x1x128xf32, #tpu.memory_space<vmem>>, vector<1x1x128xf32>,
    %47 = vector.shape_cast %44 : vector<128xf32> to vector<1x1x128xf32>
    %c0_16 = arith.constant 0 : index
    %c0_17 = arith.constant 0 : index
    %c0_18 = arith.constant 0 : index
    %48 = vector.load %arg3[%c0_16, %c0_17, %c0_18] : memref<1x1x128xf32, #tpu.memory_space<vmem>>, vector<1x1x128xf32>
    tpu.vector_store %arg3[%c0_16, %c0_17, %c0_18], %47 {strides = array<i32>} : memref<1x1x128xf32, #tpu.memory_space<vmem>>, vector<1x1x128xf32>,
    return
  }
  func.func @transform_0(%arg0: i32) -> (i32, i32) {
    %c0_i32 = arith.constant 0 : i32
    %c0_i32_0 = arith.constant 0 : i32
    return %arg0, %c0_i32 : i32, i32
  }
  func.func @transform_1(%arg0: i32) -> (i32, i32, i32) {
    %c0_i32 = arith.constant 0 : i32
    %c0_i32_0 = arith.constant 0 : i32
    %c0_i32_1 = arith.constant 0 : i32
    return %arg0, %c0_i32, %c0_i32_0 : i32, i32, i32
  }
  func.func @transform_2(%arg0: i32) -> (i32, i32, i32) {
    %c0_i32 = arith.constant 0 : i32
    %c0_i32_0 = arith.constant 0 : i32
    %c0_i32_1 = arith.constant 0 : i32
    return %arg0, %c0_i32, %c0_i32_0 : i32, i32, i32
  }
}

</mosaic_0001>

<llo_original>
// kernel: sigmoid_loss.1
$region0: #{sigmoid_loss.1}
  #allocation0 [shape = 'u32[]', space=smem, size = 0x4, offset = 0x4, fixed_abs, tag = 'smem constant byte address 0x4 - core index']
  #allocation1 [shape = 'u32[72,128]{1,0:T(1,128)}', space=vmem, size = 0x9000, scoped, tag = 'internal scratch']
  %s0 = inlined_call_operand.vmem [shape: f32[8,128], index: 0, kind: input, shape index: {}]
  %s1 = inlined_call_operand.vmem [shape: f32[1,1,128], index: 1, kind: output, shape index: {0}]
  %s2 = inlined_call_operand.vmem [shape: f32[1,1,128], index: 2, kind: output, shape index: {1}]
  %3 = xla_tuple %s1, %s2
  %s4 = sld [smem:[#allocation0]]
  $region22: #{sigmoid_loss.1} parent=0
    _
  %s6 = ssub.s32 1, %s4
  %s7 = scalar_select 0, %s6, %s4
  // Predicated region
  $region2: #{sigmoid_loss.1} parent=0 // pred_check
    _
  $region3: #{sigmoid_loss.1} parent=0 // pred_check_branch
    %9 = sbr.rel (0) target = $region5
  $region4: #{sigmoid_loss.1} parent=0 // pred_region
    _
  $region5: #{sigmoid_loss.1} parent=0 // pred_fallthru
    _
  %s10 = smul.u32 0, 1024
  %v11 = vld [vmem:[%s0] sm:$0xff]
  %v12 = vlaneseq
  %v13 = vshrl.u32 %v12, 7
  %v14 = vmul.u32 %v13, 128
  %v15 = vlaneseq
  %v16 = vand.u32 %v15, 127
  %v17 = vadd.s32 %v14, %v16
  %s18 = ssub.s32 8, %s10
  %v19 = vstv %s18
  %vm20 = vcmp.lt.s32.totalorder %v17, %v19
  %s21 = ssub.s32 16, %s10
  %v22 = vstv %s21
  %vm23 = vcmp.lt.s32.totalorder %v17, %v22
  %v24 = vsub.f32 0.0, %v11
  %v25 = vsel %vm20, %v11, %v24
  %v26 = vsub.f32 0.0, %v25
  %v27 = vmax.f32 %v26, 0.0
  %v28 = vsub.f32 0.0, %v27
  %v29 = vand.u32 2147483647, %v25
  %v30 = vsub.f32 0.0, %v29
  %v31 = vmul.f32 %v30, 1.442695
  %v32 = vpow.pop %v31
  %vm33 = vcmp.lt.f32.partialorder %v32, 0.0001
  %v34 = vmul.f32 %v32, 0.5
  %v35 = vsub.f32 1.0, %v34
  %v36 = vmul.f32 %v32, %v35
  %v37 = vadd.f32 %v32, 1.0
  %v38 = vlog2.pop %v37
  %v39 = vmul.f32 %v38, 0.6931472
  %v40 = vsel %vm33, %v36, %v39
  %v41 = vsub.f32 %v28, %v40
  %v42 = vsel %vm23, %v41, 0.0
  %v43 = vsel %vm20, %v42, 0.0
  %v44 = vrot.slane %v43, 4
  %v45 = vadd.f32 %v43, %v44
  %v46 = vrot.slane %v45, 2
  %v47 = vadd.f32 %v45, %v46
  %v48 = vrot.slane %v47, 1
  %v49 = vadd.f32 %v47, %v48
  %v50 = vrot.slane %v42, 4
  %v51 = vadd.f32 %v42, %v50
  %v52 = vrot.slane %v51, 2
  %v53 = vadd.f32 %v51, %v52
  %v54 = vrot.slane %v53, 1
  %v55 = vadd.f32 %v53, %v54
  %v56 = vsub.f32 %v55, %v49
  %57 = vst [vmem:[%s1] sm:$0x1] %v49
  %58 = vst [vmem:[%s2] sm:$0x1] %v56
  // Predicated region
  $region6: #{sigmoid_loss.1} parent=0 // pred_check
    _
  $region7: #{sigmoid_loss.1} parent=0 // pred_check_branch
    %60 = sbr.rel (0) target = $region9
  $region8: #{sigmoid_loss.1} parent=0 // pred_region
    _
  $region9: #{sigmoid_loss.1} parent=0 // pred_fallthru
    _
  // Predicated region
  $region10: #{sigmoid_loss.1} parent=0 // pred_check
    _
  $region11: #{sigmoid_loss.1} parent=0 // pred_check_branch
    %62 = sbr.rel (0) target = $region13
  $region12: #{sigmoid_loss.1} parent=0 // pred_region
    _
  $region13: #{sigmoid_loss.1} parent=0 // pred_fallthru
    _
  // Predicated region
  $region14: #{sigmoid_loss.1} parent=0 // pred_check
    _
  $region15: #{sigmoid_loss.1} parent=0 // pred_check_branch
    %64 = sbr.rel (0) target = $region17
  $region16: #{sigmoid_loss.1} parent=0 // pred_region
    _
  $region17: #{sigmoid_loss.1} parent=0 // pred_fallthru
    _
  // Predicated region
  $region18: #{sigmoid_loss.1} parent=0 // pred_check
    _
  $region19: #{sigmoid_loss.1} parent=0 // pred_check_branch
    %66 = sbr.rel (0) target = $region21
  $region20: #{sigmoid_loss.1} parent=0 // pred_region
    _
  $region21: #{sigmoid_loss.1} parent=0 // pred_fallthru
    _

</llo_original>
